<compile_context>
chip_gen: v7x
topology: tpu7x:2x2x1
jax: 0.10.0
libtpu: 0.0.40
codegen_flags: <defaults>
</compile_context>

<pallas_src>
import functools

import jax
import jax.numpy as jnp
from jax.experimental import pallas as pl
from jax.experimental.pallas import tpu as pltpu


def traffic_kernel(
    x_ref,                       # (F, TILE_B)      compute dtype
    w1_ref, b1_ref,              # (64, F), (64, 1) trunk layer 1
    w2_ref, b2_ref,              # (32, 64), (32, 1) trunk layer 2
    wh1_ref, bh1_ref,            # (32, 32), (32, 1) fused head layer 1
    wh2_ref, bh2_ref,            # (9, 32),  (9, 1)  fused block-diag head layer 2
    out_ref,                     # (9, TILE_B)      f32
):
    cdt = w1_ref.dtype           # MXU operand dtype (f32 or bf16)
    x = x_ref[...]

    # Shared trunk: ReLU(W1 @ x + b1) -> ReLU(W2 @ h1 + b2); f32 accumulation.
    h1 = jnp.dot(w1_ref[...], x, preferred_element_type=jnp.float32) + b1_ref[...]
    h1 = jnp.maximum(h1, 0.0).astype(cdt)                       # (64, TB)
    sh = jnp.dot(w2_ref[...], h1, preferred_element_type=jnp.float32) + b2_ref[...]
    sh = jnp.maximum(sh, 0.0).astype(cdt)                       # (32, TB)

    # Fused heads: rows 0-15 = mode hidden, 16-31 = purpose hidden.
    hh = jnp.dot(wh1_ref[...], sh, preferred_element_type=jnp.float32) + bh1_ref[...]
    hh = jnp.maximum(hh, 0.0).astype(cdt)                       # (32, TB)
    # Block-diagonal second layer: rows 0-2 mode logits, rows 3-8 purpose logits.
    out = jnp.dot(wh2_ref[...], hh, preferred_element_type=jnp.float32) + bh2_ref[...]
    out_ref[...] = out.astype(out_ref.dtype)                    # (9, TB) lane-dense


def pack_params(params, dtype):
    """Transpose to (out, in), fuse the two heads, cast MXU operands to `dtype`."""
    f32 = jnp.float32
    w1 = params["w1"].T.astype(dtype)                      # (64, F)
    b1 = params["b1"].T.astype(f32)                        # (64, 1)
    w2 = params["w2"].T.astype(dtype)                      # (32, 64)
    b2 = params["b2"].T.astype(f32)                        # (32, 1)

    # Head layer 1: stack mode/purpose hidden projections -> (32, 32).
    wh1 = jnp.concatenate([params["wm1"].T, params["wp1"].T], axis=0).astype(dtype)
    bh1 = jnp.concatenate([params["bm1"], params["bp1"]], axis=1).T.astype(f32)

    # Head layer 2: block-diagonal -> (num_mode + num_purpose, 32).
    wm2_t = params["wm2"].T.astype(f32)                    # (3, 16)
    wp2_t = params["wp2"].T.astype(f32)                    # (6, 16)
    nm, np_ = wm2_t.shape[0], wp2_t.shape[0]
    wh2 = jnp.block([
        [wm2_t, jnp.zeros((nm, wp2_t.shape[1]), f32)],
        [jnp.zeros((np_, wm2_t.shape[1]), f32), wp2_t],
    ]).astype(dtype)                                       # (9, 32)
    bh2 = jnp.concatenate([params["bm2"], params["bp2"]], axis=1).T.astype(f32)

    return [w1, b1, w2, b2, wh1, bh1, wh2, bh2]


@functools.partial(jax.jit, static_argnames=("dtype", "tile_b"))
def traffic_model_forward(x, params, *, dtype=jnp.float32, tile_b=512):
    """x: (B, input_size) f32. Returns (mode_logits (B,3), purpose_logits (B,6)) f32."""
    assert tile_b % 128 == 0, "tile_b must be a multiple of the 128-lane width"
    B, F = x.shape
    num_mode = params["wm2"].shape[1]
    num_purpose = params["wp2"].shape[1]
    n_out = num_mode + num_purpose

    packed = pack_params(params, dtype)

    # Pad batch to a tile multiple, flip to lane-dense (features, batch) layout.
    b_pad = tile_b * pl.cdiv(B, tile_b)
    x_t = jnp.zeros((F, b_pad), dtype).at[:, :B].set(x.T.astype(dtype))

    grid = (b_pad // tile_b,)
    in_specs = [pl.BlockSpec((F, tile_b), lambda i: (0, i))]           # streamed
    in_specs += [pl.BlockSpec(a.shape, lambda i: (0, 0)) for a in packed]  # resident
    out_spec = pl.BlockSpec((n_out, tile_b), lambda i: (0, i))         # lane-dense

    flops = 2 * b_pad * (F * 64 + 64 * 32 + 32 * 32 + 32 * n_out)
    bytes_accessed = (
        x_t.size * x_t.dtype.itemsize
        + sum(a.size * a.dtype.itemsize for a in packed)
        + b_pad * n_out * 4
    )

    out = pl.pallas_call(
        traffic_kernel,
        grid=grid,
        out_shape=jax.ShapeDtypeStruct((n_out, b_pad), jnp.float32),
        in_specs=in_specs,
        out_specs=out_spec,
        compiler_params=pltpu.CompilerParams(
            dimension_semantics=("parallel",),   # v7x: shard batch tiles over 2 TCs
        ),
        cost_estimate=pl.CostEstimate(
            flops=flops, transcendentals=0, bytes_accessed=bytes_accessed
        ),
    )(x_t, *packed)

    mode = out[:num_mode, :B].T
    purpose = out[num_mode:, :B].T
    return mode, purpose


def init_params(key, input_size, num_mode_classes, num_purpose_classes):
    """PyTorch-Linear-like uniform fan-in init; weights stored (in, out), biases (1, out)."""
    def linear(key, fan_in, fan_out):
        kw, kb = jax.random.split(key)
        bound = 1.0 / jnp.sqrt(fan_in)
        w = jax.random.uniform(kw, (fan_in, fan_out), jnp.float32, -bound, bound)
        b = jax.random.uniform(kb, (1, fan_out), jnp.float32, -bound, bound)
        return w, b

    keys = jax.random.split(key, 6)
    w1, b1 = linear(keys[0], input_size, 64)
    w2, b2 = linear(keys[1], 64, 32)
    wm1, bm1 = linear(keys[2], 32, 16)
    wm2, bm2 = linear(keys[3], 16, num_mode_classes)
    wp1, bp1 = linear(keys[4], 32, 16)
    wp2, bp2 = linear(keys[5], 16, num_purpose_classes)
    return dict(
        w1=w1, b1=b1, w2=w2, b2=b2,
        wm1=wm1, bm1=bm1, wm2=wm2, bm2=bm2,
        wp1=wp1, bp1=bp1, wp2=wp2, bp2=bp2,
    )


def reference_forward(x, p):
    relu = lambda v: jnp.maximum(v, 0.0)
    shared = relu(relu(x @ p["w1"] + p["b1"]) @ p["w2"] + p["b2"])
    mode = relu(shared @ p["wm1"] + p["bm1"]) @ p["wm2"] + p["bm2"]
    purpose = relu(shared @ p["wp1"] + p["bp1"]) @ p["wp2"] + p["bp2"]
    return mode, purpose


if __name__ == "__main__":
    input_size = 6
    num_mode_classes = 3
    num_purpose_classes = 6
    batch = 1024          # 2 grid steps at TILE_B = 512

    key = jax.random.PRNGKey(0)
    kx, kp = jax.random.split(key)
    x = jax.random.normal(kx, (batch, input_size), jnp.float32)
    params = init_params(kp, input_size, num_mode_classes, num_purpose_classes)

    ref_mode, ref_purpose = reference_forward(x, params)

    # f32 path (tight check), 2 grid steps.
    mode_out, purpose_out = traffic_model_forward(x, params, dtype=jnp.float32, tile_b=512)
    jax.block_until_ready((mode_out, purpose_out))
    assert mode_out.shape == (batch, num_mode_classes)
    assert purpose_out.shape == (batch, num_purpose_classes)
    assert jnp.allclose(mode_out, ref_mode, atol=1e-5, rtol=1e-5)
    assert jnp.allclose(purpose_out, ref_purpose, atol=1e-5, rtol=1e-5)

    # Ragged batch (exercises padding + slicing), single grid step.
    xr = x[:100]
    mode_r, purpose_r = traffic_model_forward(xr, params, dtype=jnp.float32, tile_b=512)
    jax.block_until_ready((mode_r, purpose_r))
    assert jnp.allclose(mode_r, ref_mode[:100], atol=1e-5, rtol=1e-5)
    assert jnp.allclose(purpose_r, ref_purpose[:100], atol=1e-5, rtol=1e-5)

    # bf16 MXU operands, f32 accumulation (loose check).
    mode_bf, purpose_bf = traffic_model_forward(x, params, dtype=jnp.bfloat16, tile_b=512)
    jax.block_until_ready((mode_bf, purpose_bf))
    assert jnp.allclose(mode_bf, ref_mode, atol=1.5e-1, rtol=1.5e-1)
    assert jnp.allclose(purpose_bf, ref_purpose, atol=1.5e-1, rtol=1.5e-1)

    print("KERNEL_OK")
</pallas_src>

<mosaic_0001>
module attributes {stable_mosaic.version = 11 : i64} {
  func.func @traffic_kernel(%arg0: i32, %arg1: memref<6x512xf32, #tpu.memory_space<vmem>>, %arg2: memref<64x6xf32, #tpu.memory_space<vmem>>, %arg3: memref<64x1xf32, #tpu.memory_space<vmem>>, %arg4: memref<32x64xf32, #tpu.memory_space<vmem>>, %arg5: memref<32x1xf32, #tpu.memory_space<vmem>>, %arg6: memref<32x32xf32, #tpu.memory_space<vmem>>, %arg7: memref<32x1xf32, #tpu.memory_space<vmem>>, %arg8: memref<9x32xf32, #tpu.memory_space<vmem>>, %arg9: memref<9x1xf32, #tpu.memory_space<vmem>>, %arg10: memref<9x512xf32, #tpu.memory_space<vmem>>) attributes {dimension_semantics = [#tpu.dimension_semantics<parallel>], iteration_bounds = array<i64: 2>, scalar_prefetch = 0 : i64, scratch_operands = 0 : i64, tpu.core_type = #tpu.core_type<tc>, window_params = [{transform_indices = @transform_0, window_bounds = array<i64: 6, 512>}, {pipeline_mode = #tpu.pipeline_mode<synchronous>, transform_indices = @transform_1, window_bounds = array<i64: 64, 6>}, {pipeline_mode = #tpu.pipeline_mode<synchronous>, transform_indices = @transform_2, window_bounds = array<i64: 64, 1>}, {pipeline_mode = #tpu.pipeline_mode<synchronous>, transform_indices = @transform_3, window_bounds = array<i64: 32, 64>}, {pipeline_mode = #tpu.pipeline_mode<synchronous>, transform_indices = @transform_4, window_bounds = array<i64: 32, 1>}, {pipeline_mode = #tpu.pipeline_mode<synchronous>, transform_indices = @transform_5, window_bounds = array<i64: 32, 32>}, {pipeline_mode = #tpu.pipeline_mode<synchronous>, transform_indices = @transform_6, window_bounds = array<i64: 32, 1>}, {pipeline_mode = #tpu.pipeline_mode<synchronous>, transform_indices = @transform_7, window_bounds = array<i64: 9, 32>}, {pipeline_mode = #tpu.pipeline_mode<synchronous>, transform_indices = @transform_8, window_bounds = array<i64: 9, 1>}, {transform_indices = @transform_9, window_bounds = array<i64: 9, 512>}]} {
    %c0 = arith.constant 0 : index
    %c0_0 = arith.constant 0 : index
    %0 = vector.load %arg1[%c0, %c0_0] : memref<6x512xf32, #tpu.memory_space<vmem>>, vector<6x512xf32>
    %c0_1 = arith.constant 0 : index
    %c0_2 = arith.constant 0 : index
    %1 = vector.load %arg2[%c0_1, %c0_2] : memref<64x6xf32, #tpu.memory_space<vmem>>, vector<64x6xf32>
    %cst = arith.constant dense<0.000000e+00> : vector<64x512xf32>
    %2 = tpu.matmul %1, %0, %cst {dimension_numbers = #tpu.dot_dimension_numbers<[1], [0], [0], [1], [0, 0, 1, 1], [], []>} : vector<64x6xf32>, vector<6x512xf32>, vector<64x512xf32> -> vector<64x512xf32>
    %c0_3 = arith.constant 0 : index
    %c0_4 = arith.constant 0 : index
    %3 = vector.load %arg3[%c0_3, %c0_4] : memref<64x1xf32, #tpu.memory_space<vmem>>, vector<64x1xf32>
    %4 = vector.broadcast %3 : vector<64x1xf32> to vector<64x512xf32>
    %5 = arith.addf %2, %4 : vector<64x512xf32>
    %cst_5 = arith.constant 0.000000e+00 : f32
    %6 = vector.broadcast %cst_5 : f32 to vector<64x512xf32>
    %7 = arith.maximumf %5, %6 : vector<64x512xf32>
    %c0_6 = arith.constant 0 : index
    %c0_7 = arith.constant 0 : index
    %8 = vector.load %arg4[%c0_6, %c0_7] : memref<32x64xf32, #tpu.memory_space<vmem>>, vector<32x64xf32>
    %cst_8 = arith.constant dense<0.000000e+00> : vector<32x512xf32>
    %9 = tpu.matmul %8, %7, %cst_8 {dimension_numbers = #tpu.dot_dimension_numbers<[1], [0], [0], [1], [0, 0, 1, 1], [], []>} : vector<32x64xf32>, vector<64x512xf32>, vector<32x512xf32> -> vector<32x512xf32>
    %c0_9 = arith.constant 0 : index
    %c0_10 = arith.constant 0 : index
    %10 = vector.load %arg5[%c0_9, %c0_10] : memref<32x1xf32, #tpu.memory_space<vmem>>, vector<32x1xf32>
    %11 = vector.broadcast %10 : vector<32x1xf32> to vector<32x512xf32>
    %12 = arith.addf %9, %11 : vector<32x512xf32>
    %cst_11 = arith.constant 0.000000e+00 : f32
    %13 = vector.broadcast %cst_11 : f32 to vector<32x512xf32>
    %14 = arith.maximumf %12, %13 : vector<32x512xf32>
    %c0_12 = arith.constant 0 : index
    %c0_13 = arith.constant 0 : index
    %15 = vector.load %arg6[%c0_12, %c0_13] : memref<32x32xf32, #tpu.memory_space<vmem>>, vector<32x32xf32>
    %cst_14 = arith.constant dense<0.000000e+00> : vector<32x512xf32>
    %16 = tpu.matmul %15, %14, %cst_14 {dimension_numbers = #tpu.dot_dimension_numbers<[1], [0], [0], [1], [0, 0, 1, 1], [], []>} : vector<32x32xf32>, vector<32x512xf32>, vector<32x512xf32> -> vector<32x512xf32>
    %c0_15 = arith.constant 0 : index
    %c0_16 = arith.constant 0 : index
    %17 = vector.load %arg7[%c0_15, %c0_16] : memref<32x1xf32, #tpu.memory_space<vmem>>, vector<32x1xf32>
    %18 = vector.broadcast %17 : vector<32x1xf32> to vector<32x512xf32>
    %19 = arith.addf %16, %18 : vector<32x512xf32>
    %cst_17 = arith.constant 0.000000e+00 : f32
    %20 = vector.broadcast %cst_17 : f32 to vector<32x512xf32>
    %21 = arith.maximumf %19, %20 : vector<32x512xf32>
    %c0_18 = arith.constant 0 : index
    %c0_19 = arith.constant 0 : index
    %22 = vector.load %arg8[%c0_18, %c0_19] : memref<9x32xf32, #tpu.memory_space<vmem>>, vector<9x32xf32>
    %cst_20 = arith.constant dense<0.000000e+00> : vector<9x512xf32>
    %23 = tpu.matmul %22, %21, %cst_20 {dimension_numbers = #tpu.dot_dimension_numbers<[1], [0], [0], [1], [0, 0, 1, 1], [], []>} : vector<9x32xf32>, vector<32x512xf32>, vector<9x512xf32> -> vector<9x512xf32>
    %c0_21 = arith.constant 0 : index
    %c0_22 = arith.constant 0 : index
    %24 = vector.load %arg9[%c0_21, %c0_22] : memref<9x1xf32, #tpu.memory_space<vmem>>, vector<9x1xf32>
    %25 = vector.broadcast %24 : vector<9x1xf32> to vector<9x512xf32>
    %26 = arith.addf %23, %25 : vector<9x512xf32>
    %c0_23 = arith.constant 0 : index
    %c0_24 = arith.constant 0 : index
    %27 = vector.load %arg10[%c0_23, %c0_24] : memref<9x512xf32, #tpu.memory_space<vmem>>, vector<9x512xf32>
    tpu.vector_store %arg10[%c0_23, %c0_24], %26 {strides = array<i32>} : memref<9x512xf32, #tpu.memory_space<vmem>>, vector<9x512xf32>,
    return
  }
  func.func @transform_0(%arg0: i32) -> (i32, i32) {
    %c0_i32 = arith.constant 0 : i32
    %c0_i32_0 = arith.constant 0 : i32
    return %c0_i32, %arg0 : i32, i32
  }
  func.func @transform_1(%arg0: i32) -> (i32, i32) {
    %c0_i32 = arith.constant 0 : i32
    %c0_i32_0 = arith.constant 0 : i32
    %c0_i32_1 = arith.constant 0 : i32
    return %c0_i32, %c0_i32_0 : i32, i32
  }
  func.func @transform_2(%arg0: i32) -> (i32, i32) {
    %c0_i32 = arith.constant 0 : i32
    %c0_i32_0 = arith.constant 0 : i32
    %c0_i32_1 = arith.constant 0 : i32
    return %c0_i32, %c0_i32_0 : i32, i32
  }
  func.func @transform_3(%arg0: i32) -> (i32, i32) {
    %c0_i32 = arith.constant 0 : i32
    %c0_i32_0 = arith.constant 0 : i32
    %c0_i32_1 = arith.constant 0 : i32
    return %c0_i32, %c0_i32_0 : i32, i32
  }
  func.func @transform_4(%arg0: i32) -> (i32, i32) {
    %c0_i32 = arith.constant 0 : i32
    %c0_i32_0 = arith.constant 0 : i32
    %c0_i32_1 = arith.constant 0 : i32
    return %c0_i32, %c0_i32_0 : i32, i32
  }
  func.func @transform_5(%arg0: i32) -> (i32, i32) {
    %c0_i32 = arith.constant 0 : i32
    %c0_i32_0 = arith.constant 0 : i32
    %c0_i32_1 = arith.constant 0 : i32
    return %c0_i32, %c0_i32_0 : i32, i32
  }
  func.func @transform_6(%arg0: i32) -> (i32, i32) {
    %c0_i32 = arith.constant 0 : i32
    %c0_i32_0 = arith.constant 0 : i32
    %c0_i32_1 = arith.constant 0 : i32
    return %c0_i32, %c0_i32_0 : i32, i32
  }
  func.func @transform_7(%arg0: i32) -> (i32, i32) {
    %c0_i32 = arith.constant 0 : i32
    %c0_i32_0 = arith.constant 0 : i32
    %c0_i32_1 = arith.constant 0 : i32
    return %c0_i32, %c0_i32_0 : i32, i32
  }
  func.func @transform_8(%arg0: i32) -> (i32, i32) {
    %c0_i32 = arith.constant 0 : i32
    %c0_i32_0 = arith.constant 0 : i32
    %c0_i32_1 = arith.constant 0 : i32
    return %c0_i32, %c0_i32_0 : i32, i32
  }
  func.func @transform_9(%arg0: i32) -> (i32, i32) {
    %c0_i32 = arith.constant 0 : i32
    %c0_i32_0 = arith.constant 0 : i32
    return %c0_i32, %arg0 : i32, i32
  }
}

</mosaic_0001>

<llo_original>
// kernel: traffic_model_forward.1
$region0: #{traffic_model_forward.1}
  #allocation0 [shape = 'u32[]', space=smem, size = 0x4, offset = 0x4, fixed_abs, tag = 'smem constant byte address 0x4 - core index']
  #allocation1 [shape = 'u32[144,128]{1,0:T(1,128)}', space=vmem, size = 0x12000, scoped, tag = 'internal scratch']
  %s0 = inlined_call_operand.vmem [shape: f32[6,1024], index: 0, kind: input, shape index: {}]
  %s1 = inlined_call_operand.vmem [shape: f32[64,6], index: 1, kind: input, shape index: {}]
  %s2 = inlined_call_operand.vmem [shape: f32[64,1], index: 2, kind: input, shape index: {}]
  %s3 = inlined_call_operand.vmem [shape: f32[32,64], index: 3, kind: input, shape index: {}]
  %s4 = inlined_call_operand.vmem [shape: f32[32,1], index: 4, kind: input, shape index: {}]
  %s5 = inlined_call_operand.vmem [shape: f32[32,32], index: 5, kind: input, shape index: {}]
  %s6 = inlined_call_operand.vmem [shape: f32[32,1], index: 6, kind: input, shape index: {}]
  %s7 = inlined_call_operand.vmem [shape: f32[9,32], index: 7, kind: input, shape index: {}]
  %s8 = inlined_call_operand.vmem [shape: f32[9,1], index: 8, kind: input, shape index: {}]
  %s9 = inlined_call_operand.vmem [shape: f32[9,1024], index: 9, kind: output, shape index: {}]
  %s10 = sld [smem:[#allocation0]]
  $region88: #{traffic_model_forward.1} parent=0
    _
  %s12 = ssub.s32 1, %s10
  %s13 = scalar_select 0, %s12, %s10
  $region1: #{traffic_model_forward.1} parent=0
    #allocation2 [shape = 'u8[65536]{0}', space=vmem, size = 0x10000, scoped, tag = 'output window, operand 0']
    loop: start=0, step=1, limit=4
    $region2: #{traffic_model_forward.1} parent=1 // loop_pre_header
      _
    $region3: #{traffic_model_forward.1} parent=1 // loop_header
      %s15 = sphi 0, %s19
      %p16 = scmp.ge.s32.totalorder %s15, 4
      %s25 = sphi 0, %s27
      %s28 = sphi 0, %s25
      %s29 = sphi 0, %s28
      %s45 = sphi 0, %s29
      %s49 = sphi 0, %s49
      %s51 = sphi 0, %s49
      %s52 = sphi 0, %s51
      %s66 = sphi 0, %s52
      %s70 = sphi 0, %s70
      %s72 = sphi 0, %s70
      %s73 = sphi 0, %s72
      %s87 = sphi 0, %s73
      %s91 = sphi 0, %s91
      %s93 = sphi 0, %s91
      %s94 = sphi 0, %s93
      %s108 = sphi 0, %s94
      %s112 = sphi 0, %s112
      %s114 = sphi 0, %s112
      %s115 = sphi 0, %s114
      %s129 = sphi 0, %s115
      %s133 = sphi 0, %s133
      %s135 = sphi 0, %s133
      %s136 = sphi 0, %s135
      %s150 = sphi 0, %s136
      %s154 = sphi 0, %s154
      %s156 = sphi 0, %s154
      %s157 = sphi 0, %s156
      %s171 = sphi 0, %s157
      %s175 = sphi 0, %s175
      %s177 = sphi 0, %s175
      %s178 = sphi 0, %s177
      %s192 = sphi 0, %s178
      %s196 = sphi 0, %s196
      %s198 = sphi 0, %s196
      %s199 = sphi 0, %s198
      %s213 = sphi 0, %s199
      %s219 = sphi 0, %s221
      %s222 = sphi 0, %s219
      %s223 = sphi 0, %s222
      %s239 = sphi 0, %s223
    $region4: #{traffic_model_forward.1} parent=1 // loop_header_branch
      %18 = sbr.rel (%p16) target = $region8
    $region5: #{traffic_model_forward.1} parent=1 // loop_body
      %s20 = ssub.s32 %s15, 1
      %s21 = ssub.s32 %s15, 2
      %s22 = sadd.s32 %s15, 1
      %s23 = ssub.s32 %s15, %s22
      %p24 = scmp.eq.s32.totalorder %s23, 0
      %s26 = sadd.s32 %s25, 1
      %s27 = scalar_select %p24, %s25, %s26
      %p30 = pneg %p24
      %p31 = scmp.eq.s32.totalorder %s15, 1
      %p32 = por %p30, %p31
      %p33 = scmp.ne.s32.totalorder %s25, %s28
      %p34 = scmp.eq.s32.totalorder %s15, 0
      %p35 = por %p33, %p34
      %p36 = scmp.ne.s32.totalorder %s25, %s28
      %p37 = scmp.eq.s32.totalorder %s20, 1
      %p38 = por %p36, %p37
      %p39 = scmp.ne.s32.totalorder %s28, %s29
      %p40 = scmp.eq.s32.totalorder %s20, 0
      %p41 = por %p39, %p40
      %p42 = scmp.ne.s32.totalorder %s28, %s29
      %p43 = scmp.eq.s32.totalorder %s21, 1
      %p44 = por %p42, %p43
      %p46 = scmp.ne.s32.totalorder %s29, %s45
      %p47 = scmp.eq.s32.totalorder %s21, 0
      %p48 = por %p46, %p47
      %s50 = sadd.s32 %s49, 1
      %p53 = scmp.eq.s32.totalorder %s15, 1
      %p54 = scmp.ne.s32.totalorder %s49, %s51
      %p55 = scmp.eq.s32.totalorder %s15, 0
      %p56 = por %p54, %p55
      %p57 = scmp.ne.s32.totalorder %s49, %s51
      %p58 = scmp.eq.s32.totalorder %s20, 1
      %p59 = por %p57, %p58
      %p60 = scmp.ne.s32.totalorder %s51, %s52
      %p61 = scmp.eq.s32.totalorder %s20, 0
      %p62 = por %p60, %p61
      %p63 = scmp.ne.s32.totalorder %s51, %s52
      %p64 = scmp.eq.s32.totalorder %s21, 1
      %p65 = por %p63, %p64
      %p67 = scmp.ne.s32.totalorder %s52, %s66
      %p68 = scmp.eq.s32.totalorder %s21, 0
      %p69 = por %p67, %p68
      %s71 = sadd.s32 %s70, 1
      %p74 = scmp.eq.s32.totalorder %s15, 1
      %p75 = scmp.ne.s32.totalorder %s70, %s72
      %p76 = scmp.eq.s32.totalorder %s15, 0
      %p77 = por %p75, %p76
      %p78 = scmp.ne.s32.totalorder %s70, %s72
      %p79 = scmp.eq.s32.totalorder %s20, 1
      %p80 = por %p78, %p79
      %p81 = scmp.ne.s32.totalorder %s72, %s73
      %p82 = scmp.eq.s32.totalorder %s20, 0
      %p83 = por %p81, %p82
      %p84 = scmp.ne.s32.totalorder %s72, %s73
      %p85 = scmp.eq.s32.totalorder %s21, 1
      %p86 = por %p84, %p85
      %p88 = scmp.ne.s32.totalorder %s73, %s87
      %p89 = scmp.eq.s32.totalorder %s21, 0
      %p90 = por %p88, %p89
      %s92 = sadd.s32 %s91, 1
      %p95 = scmp.eq.s32.totalorder %s15, 1
      %p96 = scmp.ne.s32.totalorder %s91, %s93
      %p97 = scmp.eq.s32.totalorder %s15, 0
      %p98 = por %p96, %p97
      %p99 = scmp.ne.s32.totalorder %s91, %s93
      %p100 = scmp.eq.s32.totalorder %s20, 1
      %p101 = por %p99, %p100
      %p102 = scmp.ne.s32.totalorder %s93, %s94
      %p103 = scmp.eq.s32.totalorder %s20, 0
      %p104 = por %p102, %p103
      %p105 = scmp.ne.s32.totalorder %s93, %s94
      %p106 = scmp.eq.s32.totalorder %s21, 1
      %p107 = por %p105, %p106
      %p109 = scmp.ne.s32.totalorder %s94, %s108
      %p110 = scmp.eq.s32.totalorder %s21, 0
      %p111 = por %p109, %p110
      %s113 = sadd.s32 %s112, 1
      %p116 = scmp.eq.s32.totalorder %s15, 1
      %p117 = scmp.ne.s32.totalorder %s112, %s114
      %p118 = scmp.eq.s32.totalorder %s15, 0
      %p119 = por %p117, %p118
      %p120 = scmp.ne.s32.totalorder %s112, %s114
      %p121 = scmp.eq.s32.totalorder %s20, 1
      %p122 = por %p120, %p121
      %p123 = scmp.ne.s32.totalorder %s114, %s115
      %p124 = scmp.eq.s32.totalorder %s20, 0
      %p125 = por %p123, %p124
      %p126 = scmp.ne.s32.totalorder %s114, %s115
      %p127 = scmp.eq.s32.totalorder %s21, 1
      %p128 = por %p126, %p127
      %p130 = scmp.ne.s32.totalorder %s115, %s129
      %p131 = scmp.eq.s32.totalorder %s21, 0
      %p132 = por %p130, %p131
      %s134 = sadd.s32 %s133, 1
      %p137 = scmp.eq.s32.totalorder %s15, 1
      %p138 = scmp.ne.s32.totalorder %s133, %s135
      %p139 = scmp.eq.s32.totalorder %s15, 0
      %p140 = por %p138, %p139
      %p141 = scmp.ne.s32.totalorder %s133, %s135
      %p142 = scmp.eq.s32.totalorder %s20, 1
      %p143 = por %p141, %p142
      %p144 = scmp.ne.s32.totalorder %s135, %s136
      %p145 = scmp.eq.s32.totalorder %s20, 0
      %p146 = por %p144, %p145
      %p147 = scmp.ne.s32.totalorder %s135, %s136
      %p148 = scmp.eq.s32.totalorder %s21, 1
      %p149 = por %p147, %p148
      %p151 = scmp.ne.s32.totalorder %s136, %s150
      %p152 = scmp.eq.s32.totalorder %s21, 0
      %p153 = por %p151, %p152
      %s155 = sadd.s32 %s154, 1
      %p158 = scmp.eq.s32.totalorder %s15, 1
      %p159 = scmp.ne.s32.totalorder %s154, %s156
      %p160 = scmp.eq.s32.totalorder %s15, 0
      %p161 = por %p159, %p160
      %p162 = scmp.ne.s32.totalorder %s154, %s156
      %p163 = scmp.eq.s32.totalorder %s20, 1
      %p164 = por %p162, %p163
      %p165 = scmp.ne.s32.totalorder %s156, %s157
      %p166 = scmp.eq.s32.totalorder %s20, 0
      %p167 = por %p165, %p166
      %p168 = scmp.ne.s32.totalorder %s156, %s157
      %p169 = scmp.eq.s32.totalorder %s21, 1
      %p170 = por %p168, %p169
      %p172 = scmp.ne.s32.totalorder %s157, %s171
      %p173 = scmp.eq.s32.totalorder %s21, 0
      %p174 = por %p172, %p173
      %s176 = sadd.s32 %s175, 1
      %p179 = scmp.eq.s32.totalorder %s15, 1
      %p180 = scmp.ne.s32.totalorder %s175, %s177
      %p181 = scmp.eq.s32.totalorder %s15, 0
      %p182 = por %p180, %p181
      %p183 = scmp.ne.s32.totalorder %s175, %s177
      %p184 = scmp.eq.s32.totalorder %s20, 1
      %p185 = por %p183, %p184
      %p186 = scmp.ne.s32.totalorder %s177, %s178
      %p187 = scmp.eq.s32.totalorder %s20, 0
      %p188 = por %p186, %p187
      %p189 = scmp.ne.s32.totalorder %s177, %s178
      %p190 = scmp.eq.s32.totalorder %s21, 1
      %p191 = por %p189, %p190
      %p193 = scmp.ne.s32.totalorder %s178, %s192
      %p194 = scmp.eq.s32.totalorder %s21, 0
      %p195 = por %p193, %p194
      %s197 = sadd.s32 %s196, 1
      %p200 = scmp.eq.s32.totalorder %s15, 1
      %p201 = scmp.ne.s32.totalorder %s196, %s198
      %p202 = scmp.eq.s32.totalorder %s15, 0
      %p203 = por %p201, %p202
      %p204 = scmp.ne.s32.totalorder %s196, %s198
      %p205 = scmp.eq.s32.totalorder %s20, 1
      %p206 = por %p204, %p205
      %p207 = scmp.ne.s32.totalorder %s198, %s199
      %p208 = scmp.eq.s32.totalorder %s20, 0
      %p209 = por %p207, %p208
      %p210 = scmp.ne.s32.totalorder %s198, %s199
      %p211 = scmp.eq.s32.totalorder %s21, 1
      %p212 = por %p210, %p211
      %p214 = scmp.ne.s32.totalorder %s199, %s213
      %p215 = scmp.eq.s32.totalorder %s21, 0
      %p216 = por %p214, %p215
      %s217 = ssub.s32 %s15, %s22
      %p218 = scmp.eq.s32.totalorder %s217, 0
      %s220 = sadd.s32 %s219, 1
      %s221 = scalar_select %p218, %s219, %s220
      %p224 = pneg %p218
      %p225 = scmp.eq.s32.totalorder %s15, 1
      %p226 = por %p224, %p225
      %p227 = scmp.ne.s32.totalorder %s219, %s222
      %p228 = scmp.eq.s32.totalorder %s15, 0
      %p229 = por %p227, %p228
      %p230 = scmp.ne.s32.totalorder %s219, %s222
      %p231 = scmp.eq.s32.totalorder %s20, 1
      %p232 = por %p230, %p231
      %p233 = scmp.ne.s32.totalorder %s222, %s223
      %p234 = scmp.eq.s32.totalorder %s20, 0
      %p235 = por %p233, %p234
      %p236 = scmp.ne.s32.totalorder %s222, %s223
      %p237 = scmp.eq.s32.totalorder %s21, 1
      %p238 = por %p236, %p237
      %p240 = scmp.ne.s32.totalorder %s223, %s239
      %p241 = scmp.eq.s32.totalorder %s21, 0
      %p242 = por %p240, %p241
      %p243 = scmp.le.s32.totalorder 1, %s15
      %p244 = scmp.lt.s32.totalorder %s15, 3
      %p245 = pnand %p243, %p244
      %p246 = pneg %p245
      // Predicated region
      $region9: #{traffic_model_forward.1} parent=5 // pred_check
        _
      $region10: #{traffic_model_forward.1} parent=5 // pred_check_branch
        %248 = sbr.rel (%p245) target = $region12
      $region11: #{traffic_model_forward.1} parent=5 // pred_region
        %s249 = ssub.s32 %s15, 1
        // Predicated region
        $region13: #{traffic_model_forward.1} parent=11 // pred_check
          %p250 = pneg %p62
        $region14: #{traffic_model_forward.1} parent=11 // pred_check_branch
          %252 = sbr.rel (%p250) target = $region16
        $region15: #{traffic_model_forward.1} parent=11 // pred_region
          _
        $region16: #{traffic_model_forward.1} parent=11 // pred_fallthru
          _
        // Predicated region
        $region17: #{traffic_model_forward.1} parent=11 // pred_check
          %p253 = pneg %p83
        $region18: #{traffic_model_forward.1} parent=11 // pred_check_branch
          %255 = sbr.rel (%p253) target = $region20
        $region19: #{traffic_model_forward.1} parent=11 // pred_region
          _
        $region20: #{traffic_model_forward.1} parent=11 // pred_fallthru
          _
        // Predicated region
        $region21: #{traffic_model_forward.1} parent=11 // pred_check
          %p256 = pneg %p104
        $region22: #{traffic_model_forward.1} parent=11 // pred_check_branch
          %258 = sbr.rel (%p256) target = $region24
        $region23: #{traffic_model_forward.1} parent=11 // pred_region
          _
        $region24: #{traffic_model_forward.1} parent=11 // pred_fallthru
          _
        // Predicated region
        $region25: #{traffic_model_forward.1} parent=11 // pred_check
          %p259 = pneg %p125
        $region26: #{traffic_model_forward.1} parent=11 // pred_check_branch
          %261 = sbr.rel (%p259) target = $region28
        $region27: #{traffic_model_forward.1} parent=11 // pred_region
          _
        $region28: #{traffic_model_forward.1} parent=11 // pred_fallthru
          _
        // Predicated region
        $region29: #{traffic_model_forward.1} parent=11 // pred_check
          %p262 = pneg %p146
        $region30: #{traffic_model_forward.1} parent=11 // pred_check_branch
          %264 = sbr.rel (%p262) target = $region32
        $region31: #{traffic_model_forward.1} parent=11 // pred_region
          _
        $region32: #{traffic_model_forward.1} parent=11 // pred_fallthru
          _
        // Predicated region
        $region33: #{traffic_model_forward.1} parent=11 // pred_check
          %p265 = pneg %p167
        $region34: #{traffic_model_forward.1} parent=11 // pred_check_branch
          %267 = sbr.rel (%p265) target = $region36
        $region35: #{traffic_model_forward.1} parent=11 // pred_region
          _
        $region36: #{traffic_model_forward.1} parent=11 // pred_fallthru
          _
        // Predicated region
        $region37: #{traffic_model_forward.1} parent=11 // pred_check
          %p268 = pneg %p188
        $region38: #{traffic_model_forward.1} parent=11 // pred_check_branch
          %270 = sbr.rel (%p268) target = $region40
        $region39: #{traffic_model_forward.1} parent=11 // pred_region
          _
        $region40: #{traffic_model_forward.1} parent=11 // pred_fallthru
          _
        // Predicated region
        $region41: #{traffic_model_forward.1} parent=11 // pred_check
          %p271 = pneg %p209
        $region42: #{traffic_model_forward.1} parent=11 // pred_check_branch
          %273 = sbr.rel (%p271) target = $region44
        $region43: #{traffic_model_forward.1} parent=11 // pred_region
          _
        $region44: #{traffic_model_forward.1} parent=11 // pred_fallthru
          _
      $region12: #{traffic_model_forward.1} parent=5 // pred_fallthru
        _
      %p274 = scmp.lt.s32.totalorder %s15, 2
      // Predicated region
      $region45: #{traffic_model_forward.1} parent=5 // pred_check
        %p275 = pneg %p274
      $region46: #{traffic_model_forward.1} parent=5 // pred_check_branch
        %277 = sbr.rel (%p275) target = $region48
      $region47: #{traffic_model_forward.1} parent=5 // pred_region
        // Predicated region
        $region49: #{traffic_model_forward.1} parent=47 // pred_check
          %p278 = pneg %p35
        $region50: #{traffic_model_forward.1} parent=47 // pred_check_branch
          %280 = sbr.rel (%p278) target = $region52
        $region51: #{traffic_model_forward.1} parent=47 // pred_region
          %s281 = smul.u32 4, %s15
          %p282 = scmp.lt.s32.totalorder %s281, 7
          %s283 = scalar_select %p282, %s281, 7
          %s284 = smul.addr %s283, 8
          %s285 = scalar_lea.vmem %s0, %s284
          %s286 = smul.u32 4, %s15
        $region52: #{traffic_model_forward.1} parent=47 // pred_fallthru
          _
      $region48: #{traffic_model_forward.1} parent=5 // pred_fallthru
        _
      %p287 = scmp.le.s32.totalorder 1, %s15
      %p288 = scmp.lt.s32.totalorder %s15, 3
      %p289 = pnand %p287, %p288
      %p290 = pneg %p289
      // Predicated region
      $region53: #{traffic_model_forward.1} parent=5 // pred_check
        _
      $region54: #{traffic_model_forward.1} parent=5 // pred_check_branch
        %292 = sbr.rel (%p289) target = $region56
      $region55: #{traffic_model_forward.1} parent=5 // pred_region
        %s293 = ssub.s32 %s15, 1
        %s294 = smul.u32 4, %s20
        %p295 = scmp.lt.s32.totalorder %s294, 7
        %s296 = scalar_select %p295, %s294, 7
        %s297 = smul.addr %s296, 8
        %s298 = scalar_lea.vmem %s0, %s297
        %p299 = pneg %p41
        %p300 = pneg %p38
        %p301 = pneg %p62
        %p302 = pneg %p59
        %p303 = pneg %p83
        %p304 = pneg %p80
        %p305 = pneg %p104
        %p306 = pneg %p101
        %p307 = pneg %p125
        %p308 = pneg %p122
        %p309 = pneg %p146
        %p310 = pneg %p143
        %p311 = pneg %p167
        %p312 = pneg %p164
        %p313 = pneg %p188
        %p314 = pneg %p185
        %p315 = pneg %p209
        %p316 = pneg %p206
        %p317 = pneg %p235
        %p318 = pneg %p232
        %s319 = sand.u32 %s222, 1
        %s320 = sand.u32 %s222, 1
        %s321 = smul.addr %s320, 64
        %s322 = scalar_lea.vmem [#allocation2], %s321
        %s323 = smul.u32 4, %s20
        %p324 = scmp.lt.s32.totalorder %s323, 7
        %s325 = scalar_select %p324, %s323, 7
        %s326 = smul.addr %s325, 8
        %s327 = scalar_lea.vmem %s0, %s326
        %s328 = smul.u32 4, %s20
        %s329 = smul.u32 4, %s20
        %v330 = vld [vmem:[%s327] sm:$0x3f]
        %v331 = vld [vmem:[%s327 + $0x8] sm:$0x3f]
        %v332 = vld [vmem:[%s327 + $0x10] sm:$0x3f]
        %v333 = vld [vmem:[%s327 + $0x18] sm:$0x3f]
        %v334 = vld [vmem:[%s1] sm:$0xff]
        %v335 = vld [vmem:[%s1 + $0x8] sm:$0xff]
        %v336 = vld [vmem:[%s1 + $0x10] sm:$0xff]
        %v337 = vld [vmem:[%s1 + $0x18] sm:$0xff]
        %v338 = vld [vmem:[%s1 + $0x20] sm:$0xff]
        %v339 = vld [vmem:[%s1 + $0x28] sm:$0xff]
        %v340 = vld [vmem:[%s1 + $0x30] sm:$0xff]
        %v341 = vld [vmem:[%s1 + $0x38] sm:$0xff]
        %v342 = vld [vmem:[%s2] sm:$0xff]
        %v343 = vld [vmem:[%s2 + $0x8] sm:$0xff]
        %v344 = vld [vmem:[%s2 + $0x10] sm:$0xff]
        %v345 = vld [vmem:[%s2 + $0x18] sm:$0xff]
        %v346 = vld [vmem:[%s2 + $0x20] sm:$0xff]
        %v347 = vld [vmem:[%s2 + $0x28] sm:$0xff]
        %v348 = vld [vmem:[%s2 + $0x30] sm:$0xff]
        %v349 = vld [vmem:[%s2 + $0x38] sm:$0xff]
        %351 = vset.pattern.permute.xlu0 0
        %352 = vperm.xlu0 %351, %v342
        %v353 = vpop.permute.xlu0 %352
        %356 = vset.pattern.permute.xlu0 0
        %357 = vperm.xlu0 %356, %v343
        %v358 = vpop.permute.xlu0 %357
        %361 = vset.pattern.permute.xlu0 0
        %362 = vperm.xlu0 %361, %v344
        %v363 = vpop.permute.xlu0 %362
        %366 = vset.pattern.permute.xlu0 0
        %367 = vperm.xlu0 %366, %v345
        %v368 = vpop.permute.xlu0 %367
        %371 = vset.pattern.permute.xlu0 0
        %372 = vperm.xlu0 %371, %v346
        %v373 = vpop.permute.xlu0 %372
        %376 = vset.pattern.permute.xlu0 0
        %377 = vperm.xlu0 %376, %v347
        %v378 = vpop.permute.xlu0 %377
        %381 = vset.pattern.permute.xlu0 0
        %382 = vperm.xlu0 %381, %v348
        %v383 = vpop.permute.xlu0 %382
        %386 = vset.pattern.permute.xlu0 0
        %387 = vperm.xlu0 %386, %v349
        %v388 = vpop.permute.xlu0 %387
        %vm390 = vcmask 48128
        %v392 = vsel %vm390, %v334, 0
        %v395 = vsel %vm390, %v335, 0
        %v398 = vsel %vm390, %v336, 0
        %v401 = vsel %vm390, %v337, 0
        %v404 = vsel %vm390, %v338, 0
        %v407 = vsel %vm390, %v339, 0
        %v410 = vsel %vm390, %v340, 0
        %v413 = vsel %vm390, %v341, 0
        %vm415 = vcmask 1045504
        %v417 = vsel %vm415, %v330, 0
        %v420 = vsel %vm415, %v331, 0
        %v423 = vsel %vm415, %v332, 0
        %v426 = vsel %vm415, %v333, 0
        %428 = vmatprep.subr.mxu0 %v420
        %429 = vmatpush1.msra.mxu0 %v417
        %430 = vmatprep.subr.mxu0 0.0
        %431 = vmatpush1.msra.mxu0 0.0
        %432 = vmatprep.subr.mxu0 0.0
        %433 = vmatpush1.msra.mxu0 0.0
        %434 = vmatprep.subr.mxu0 0.0
        %435 = vmatpush1.msra.mxu0 0.0
        %436 = vmatprep.subr.mxu0 0.0
        %437 = vmatpush1.msra.mxu0 0.0
        %438 = vmatprep.subr.mxu0 0.0
        %439 = vmatpush1.msra.mxu0 0.0
        %440 = vmatprep.subr.mxu0 0.0
        %441 = vmatpush1.msra.mxu0 0.0
        %442 = vmatprep.subr.mxu0 0.0
        %443 = vmatpush1.msra.mxu0 0.0
        %444 = vmatprep.subr.mxu0 0.0
        %445 = vmatpush1.msra.mxu0 0.0
        %446 = vmatprep.subr.mxu0 0.0
        %447 = vmatpush1.msra.mxu0 0.0
        %448 = vmatprep.subr.mxu0 0.0
        %449 = vmatpush1.msra.mxu0 0.0
        %450 = vmatprep.subr.mxu0 0.0
        %451 = vmatpush1.msra.mxu0 0.0
        %452 = vmatprep.subr.mxu0 0.0
        %453 = vmatpush1.msra.mxu0 0.0
        %454 = vmatprep.subr.mxu0 0.0
        %455 = vmatpush1.msra.mxu0 0.0
        %456 = vmatprep.subr.mxu0 0.0
        %457 = vmatpush1.msra.mxu0 0.0
        %458 = vmatprep.subr.mxu0 0.0
        %459 = vmatpush1.msra.mxu0 0.0
        %460 = vmatprep.subr.mxu0 0.0
        %461 = vmatpush1.msra.mxu0 0.0
        %462 = vmatprep.subr.mxu0 0.0
        %463 = vmatpush1.msra.mxu0 0.0
        %464 = vmatprep.subr.mxu0 0.0
        %465 = vmatpush1.msra.mxu0 0.0
        %466 = vmatprep.subr.mxu0 0.0
        %467 = vmatpush1.msra.mxu0 0.0
        %468 = vmatprep.subr.mxu0 0.0
        %469 = vmatpush1.msra.mxu0 0.0
        %470 = vmatprep.subr.mxu0 0.0
        %471 = vmatpush1.msra.mxu0 0.0
        %472 = vmatprep.subr.mxu0 0.0
        %473 = vmatpush1.msra.mxu0 0.0
        %474 = vmatprep.subr.mxu0 0.0
        %475 = vmatpush1.msra.mxu0 0.0
        %476 = vmatprep.subr.mxu0 0.0
        %477 = vmatpush1.msra.mxu0 0.0
        %478 = vmatprep.subr.mxu0 0.0
        %479 = vmatpush1.msra.mxu0 0.0
        %480 = vmatprep.subr.mxu0 0.0
        %481 = vmatpush1.msra.mxu0 0.0
        %482 = vmatprep.subr.mxu0 0.0
        %483 = vmatpush1.msra.mxu0 0.0
        %484 = vmatprep.subr.mxu0 0.0
        %485 = vmatpush1.msra.mxu0 0.0
        %486 = vmatprep.subr.mxu0 0.0
        %487 = vmatpush1.msra.mxu0 0.0
        %488 = vmatprep.subr.mxu0 0.0
        %489 = vmatpush1.msra.mxu0 0.0
        %490 = vmatprep.subr.mxu0 0.0
        %491 = vmatpush1.msra.mxu0 0.0
        %492 = vmatprep.mubr.f32.mxu0 0.0
        %493 = vmatmul.mubr.f32.gmra.mrb[0].mxu0 %v392
        %v494 = vpop.f32.mrb[0].mxu0
        %v495 = vadd.f32 %v353, %v494
        %v496 = vpop.f32.mrb[0].mxu0
        %v497 = vadd.f32 %v353, %v496
        %498 = vmatprep.mubr.f32.mxu0 0.0
        %499 = vmatmul.mubr.f32.gmra.mrb[0].mxu0 %v395
        %v500 = vpop.f32.mrb[0].mxu0
        %v501 = vadd.f32 %v358, %v500
        %v502 = vpop.f32.mrb[0].mxu0
        %v503 = vadd.f32 %v358, %v502
        %504 = vmatprep.mubr.f32.mxu0 0.0
        %505 = vmatmul.mubr.f32.gmra.mrb[0].mxu0 %v398
        %v506 = vpop.f32.mrb[0].mxu0
        %v507 = vadd.f32 %v363, %v506
        %v508 = vpop.f32.mrb[0].mxu0
        %v509 = vadd.f32 %v363, %v508
        %510 = vmatprep.mubr.f32.mxu0 0.0
        %511 = vmatmul.mubr.f32.gmra.mrb[0].mxu0 %v401
        %v512 = vpop.f32.mrb[0].mxu0
        %v513 = vadd.f32 %v368, %v512
        %v514 = vpop.f32.mrb[0].mxu0
        %v515 = vadd.f32 %v368, %v514
        %516 = vmatprep.mubr.f32.mxu0 0.0
        %517 = vmatmul.mubr.f32.gmra.mrb[0].mxu0 %v404
        %v518 = vpop.f32.mrb[0].mxu0
        %v519 = vadd.f32 %v373, %v518
        %v520 = vpop.f32.mrb[0].mxu0
        %v521 = vadd.f32 %v373, %v520
        %522 = vmatprep.mubr.f32.mxu0 0.0
        %523 = vmatmul.mubr.f32.gmra.mrb[0].mxu0 %v407
        %v524 = vpop.f32.mrb[0].mxu0
        %v525 = vadd.f32 %v378, %v524
        %v526 = vpop.f32.mrb[0].mxu0
        %v527 = vadd.f32 %v378, %v526
        %528 = vmatprep.mubr.f32.mxu0 0.0
        %529 = vmatmul.mubr.f32.gmra.mrb[0].mxu0 %v410
        %v530 = vpop.f32.mrb[0].mxu0
        %v531 = vadd.f32 %v383, %v530
        %v532 = vpop.f32.mrb[0].mxu0
        %v533 = vadd.f32 %v383, %v532
        %534 = vmatprep.mubr.f32.mxu0 0.0
        %535 = vmatmul.mubr.f32.gmra.mrb[0].mxu0 %v413
        %v536 = vpop.f32.mrb[0].mxu0
        %v537 = vadd.f32 %v388, %v536
        %v538 = vpop.f32.mrb[0].mxu0
        %v539 = vadd.f32 %v388, %v538
        %540 = vdwg.mxu0
        %541 = vmatprep.subr.mxu0 %v426
        %542 = vmatpush1.msra.mxu0 %v423
        %543 = vmatprep.subr.mxu0 0.0
        %544 = vmatpush1.msra.mxu0 0.0
        %545 = vmatprep.subr.mxu0 0.0
        %546 = vmatpush1.msra.mxu0 0.0
        %547 = vmatprep.subr.mxu0 0.0
        %548 = vmatpush1.msra.mxu0 0.0
        %549 = vmatprep.subr.mxu0 0.0
        %550 = vmatpush1.msra.mxu0 0.0
        %551 = vmatprep.subr.mxu0 0.0
        %552 = vmatpush1.msra.mxu0 0.0
        %553 = vmatprep.subr.mxu0 0.0
        %554 = vmatpush1.msra.mxu0 0.0
        %555 = vmatprep.subr.mxu0 0.0
        %556 = vmatpush1.msra.mxu0 0.0
        %557 = vmatprep.subr.mxu0 0.0
        %558 = vmatpush1.msra.mxu0 0.0
        %559 = vmatprep.subr.mxu0 0.0
        %560 = vmatpush1.msra.mxu0 0.0
        %561 = vmatprep.subr.mxu0 0.0
        %562 = vmatpush1.msra.mxu0 0.0
        %563 = vmatprep.subr.mxu0 0.0
        %564 = vmatpush1.msra.mxu0 0.0
        %565 = vmatprep.subr.mxu0 0.0
        %566 = vmatpush1.msra.mxu0 0.0
        %567 = vmatprep.subr.mxu0 0.0
        %568 = vmatpush1.msra.mxu0 0.0
        %569 = vmatprep.subr.mxu0 0.0
        %570 = vmatpush1.msra.mxu0 0.0
        %571 = vmatprep.subr.mxu0 0.0
        %572 = vmatpush1.msra.mxu0 0.0
        %573 = vmatprep.subr.mxu0 0.0
        %574 = vmatpush1.msra.mxu0 0.0
        %575 = vmatprep.subr.mxu0 0.0
        %576 = vmatpush1.msra.mxu0 0.0
        %577 = vmatprep.subr.mxu0 0.0
        %578 = vmatpush1.msra.mxu0 0.0
        %579 = vmatprep.subr.mxu0 0.0
        %580 = vmatpush1.msra.mxu0 0.0
        %581 = vmatprep.subr.mxu0 0.0
        %582 = vmatpush1.msra.mxu0 0.0
        %583 = vmatprep.subr.mxu0 0.0
        %584 = vmatpush1.msra.mxu0 0.0
        %585 = vmatprep.subr.mxu0 0.0
        %586 = vmatpush1.msra.mxu0 0.0
        %587 = vmatprep.subr.mxu0 0.0
        %588 = vmatpush1.msra.mxu0 0.0
        %589 = vmatprep.subr.mxu0 0.0
        %590 = vmatpush1.msra.mxu0 0.0
        %591 = vmatprep.subr.mxu0 0.0
        %592 = vmatpush1.msra.mxu0 0.0
        %593 = vmatprep.subr.mxu0 0.0
        %594 = vmatpush1.msra.mxu0 0.0
        %595 = vmatprep.subr.mxu0 0.0
        %596 = vmatpush1.msra.mxu0 0.0
        %597 = vmatprep.subr.mxu0 0.0
        %598 = vmatpush1.msra.mxu0 0.0
        %599 = vmatprep.subr.mxu0 0.0
        %600 = vmatpush1.msra.mxu0 0.0
        %601 = vmatprep.subr.mxu0 0.0
        %602 = vmatpush1.msra.mxu0 0.0
        %603 = vmatprep.subr.mxu0 0.0
        %604 = vmatpush1.msra.mxu0 0.0
        %605 = vmatprep.mubr.f32.mxu0 0.0
        %606 = vmatmul.mubr.f32.gmra.mrb[0].mxu0 %v392
        %v607 = vpop.f32.mrb[0].mxu0
        %v608 = vadd.f32 %v353, %v607
        %v609 = vpop.f32.mrb[0].mxu0
        %v610 = vadd.f32 %v353, %v609
        %611 = vmatprep.mubr.f32.mxu0 0.0
        %612 = vmatmul.mubr.f32.gmra.mrb[0].mxu0 %v395
        %v613 = vpop.f32.mrb[0].mxu0
        %v614 = vadd.f32 %v358, %v613
        %v615 = vpop.f32.mrb[0].mxu0
        %v616 = vadd.f32 %v358, %v615
        %617 = vmatprep.mubr.f32.mxu0 0.0
        %618 = vmatmul.mubr.f32.gmra.mrb[0].mxu0 %v398
        %v619 = vpop.f32.mrb[0].mxu0
        %v620 = vadd.f32 %v363, %v619
        %v621 = vpop.f32.mrb[0].mxu0
        %v622 = vadd.f32 %v363, %v621
        %623 = vmatprep.mubr.f32.mxu0 0.0
        %624 = vmatmul.mubr.f32.gmra.mrb[0].mxu0 %v401
        %v625 = vpop.f32.mrb[0].mxu0
        %v626 = vadd.f32 %v368, %v625
        %v627 = vpop.f32.mrb[0].mxu0
        %v628 = vadd.f32 %v368, %v627
        %629 = vmatprep.mubr.f32.mxu0 0.0
        %630 = vmatmul.mubr.f32.gmra.mrb[0].mxu0 %v404
        %v631 = vpop.f32.mrb[0].mxu0
        %v632 = vadd.f32 %v373, %v631
        %v633 = vpop.f32.mrb[0].mxu0
        %v634 = vadd.f32 %v373, %v633
        %635 = vmatprep.mubr.f32.mxu0 0.0
        %636 = vmatmul.mubr.f32.gmra.mrb[0].mxu0 %v407
        %v637 = vpop.f32.mrb[0].mxu0
        %v638 = vadd.f32 %v378, %v637
        %v639 = vpop.f32.mrb[0].mxu0
        %v640 = vadd.f32 %v378, %v639
        %641 = vmatprep.mubr.f32.mxu0 0.0
        %642 = vmatmul.mubr.f32.gmra.mrb[0].mxu0 %v410
        %v643 = vpop.f32.mrb[0].mxu0
        %v644 = vadd.f32 %v383, %v643
        %v645 = vpop.f32.mrb[0].mxu0
        %v646 = vadd.f32 %v383, %v645
        %647 = vmatprep.mubr.f32.mxu0 0.0
        %648 = vmatmul.mubr.f32.gmra.mrb[0].mxu0 %v413
        %v649 = vpop.f32.mrb[0].mxu0
        %v650 = vadd.f32 %v388, %v649
        %v651 = vpop.f32.mrb[0].mxu0
        %v652 = vadd.f32 %v388, %v651
        %653 = vdwg.mxu0
        %v654 = vmax.f32 %v495, 0.0
        %v655 = vmax.f32 %v497, 0.0
        %v656 = vmax.f32 %v608, 0.0
        %v657 = vmax.f32 %v610, 0.0
        %v658 = vmax.f32 %v501, 0.0
        %v659 = vmax.f32 %v503, 0.0
        %v660 = vmax.f32 %v614, 0.0
        %v661 = vmax.f32 %v616, 0.0
        %v662 = vmax.f32 %v507, 0.0
        %v663 = vmax.f32 %v509, 0.0
        %v664 = vmax.f32 %v620, 0.0
        %v665 = vmax.f32 %v622, 0.0
        %v666 = vmax.f32 %v513, 0.0
        %v667 = vmax.f32 %v515, 0.0
        %v668 = vmax.f32 %v626, 0.0
        %v669 = vmax.f32 %v628, 0.0
        %v670 = vmax.f32 %v519, 0.0
        %v671 = vmax.f32 %v521, 0.0
        %v672 = vmax.f32 %v632, 0.0
        %v673 = vmax.f32 %v634, 0.0
        %v674 = vmax.f32 %v525, 0.0
        %v675 = vmax.f32 %v527, 0.0
        %v676 = vmax.f32 %v638, 0.0
        %v677 = vmax.f32 %v640, 0.0
        %v678 = vmax.f32 %v531, 0.0
        %v679 = vmax.f32 %v533, 0.0
        %v680 = vmax.f32 %v644, 0.0
        %v681 = vmax.f32 %v646, 0.0
        %v682 = vmax.f32 %v537, 0.0
        %v683 = vmax.f32 %v539, 0.0
        %v684 = vmax.f32 %v650, 0.0
        %v685 = vmax.f32 %v652, 0.0
        %v686 = vld [vmem:[%s3] sm:$0xff]
        %v687 = vld [vmem:[%s3 + $0x8] sm:$0xff]
        %v688 = vld [vmem:[%s3 + $0x10] sm:$0xff]
        %v689 = vld [vmem:[%s3 + $0x18] sm:$0xff]
        %v690 = vld [vmem:[%s4] sm:$0xff]
        %v691 = vld [vmem:[%s4 + $0x8] sm:$0xff]
        %v692 = vld [vmem:[%s4 + $0x10] sm:$0xff]
        %v693 = vld [vmem:[%s4 + $0x18] sm:$0xff]
        %695 = vset.pattern.permute.xlu0 0
        %696 = vperm.xlu0 %695, %v690
        %v697 = vpop.permute.xlu0 %696
        %700 = vset.pattern.permute.xlu0 0
        %701 = vperm.xlu0 %700, %v691
        %v702 = vpop.permute.xlu0 %701
        %705 = vset.pattern.permute.xlu0 0
        %706 = vperm.xlu0 %705, %v692
        %v707 = vpop.permute.xlu0 %706
        %710 = vset.pattern.permute.xlu0 0
        %711 = vperm.xlu0 %710, %v693
        %v712 = vpop.permute.xlu0 %711
        %vm714 = vcmask 523264
        %v716 = vsel %vm714, %v686, 0
        %v719 = vsel %vm714, %v687, 0
        %v722 = vsel %vm714, %v688, 0
        %v725 = vsel %vm714, %v689, 0
        %727 = vmatprep.subr.mxu0 %v655
        %728 = vmatpush1.msra.mxu0 %v654
        %729 = vmatprep.subr.mxu0 %v659
        %730 = vmatpush1.msra.mxu0 %v658
        %731 = vmatprep.subr.mxu0 %v663
        %732 = vmatpush1.msra.mxu0 %v662
        %733 = vmatprep.subr.mxu0 %v667
        %734 = vmatpush1.msra.mxu0 %v666
        %735 = vmatprep.subr.mxu0 %v671
        %736 = vmatpush1.msra.mxu0 %v670
        %737 = vmatprep.subr.mxu0 %v675
        %738 = vmatpush1.msra.mxu0 %v674
        %739 = vmatprep.subr.mxu0 %v679
        %740 = vmatpush1.msra.mxu0 %v678
        %741 = vmatprep.subr.mxu0 %v683
        %742 = vmatpush1.msra.mxu0 %v682
        %743 = vmatprep.subr.mxu0 0.0
        %744 = vmatpush1.msra.mxu0 0.0
        %745 = vmatprep.subr.mxu0 0.0
        %746 = vmatpush1.msra.mxu0 0.0
        %747 = vmatprep.subr.mxu0 0.0
        %748 = vmatpush1.msra.mxu0 0.0
        %749 = vmatprep.subr.mxu0 0.0
        %750 = vmatpush1.msra.mxu0 0.0
        %751 = vmatprep.subr.mxu0 0.0
        %752 = vmatpush1.msra.mxu0 0.0
        %753 = vmatprep.subr.mxu0 0.0
        %754 = vmatpush1.msra.mxu0 0.0
        %755 = vmatprep.subr.mxu0 0.0
        %756 = vmatpush1.msra.mxu0 0.0
        %757 = vmatprep.subr.mxu0 0.0
        %758 = vmatpush1.msra.mxu0 0.0
        %759 = vmatprep.subr.mxu0 0.0
        %760 = vmatpush1.msra.mxu0 0.0
        %761 = vmatprep.subr.mxu0 0.0
        %762 = vmatpush1.msra.mxu0 0.0
        %763 = vmatprep.subr.mxu0 0.0
        %764 = vmatpush1.msra.mxu0 0.0
        %765 = vmatprep.subr.mxu0 0.0
        %766 = vmatpush1.msra.mxu0 0.0
        %767 = vmatprep.subr.mxu0 0.0
        %768 = vmatpush1.msra.mxu0 0.0
        %769 = vmatprep.subr.mxu0 0.0
        %770 = vmatpush1.msra.mxu0 0.0
        %771 = vmatprep.subr.mxu0 0.0
        %772 = vmatpush1.msra.mxu0 0.0
        %773 = vmatprep.subr.mxu0 0.0
        %774 = vmatpush1.msra.mxu0 0.0
        %775 = vmatprep.subr.mxu0 0.0
        %776 = vmatpush1.msra.mxu0 0.0
        %777 = vmatprep.subr.mxu0 0.0
        %778 = vmatpush1.msra.mxu0 0.0
        %779 = vmatprep.subr.mxu0 0.0
        %780 = vmatpush1.msra.mxu0 0.0
        %781 = vmatprep.subr.mxu0 0.0
        %782 = vmatpush1.msra.mxu0 0.0
        %783 = vmatprep.subr.mxu0 0.0
        %784 = vmatpush1.msra.mxu0 0.0
        %785 = vmatprep.subr.mxu0 0.0
        %786 = vmatpush1.msra.mxu0 0.0
        %787 = vmatprep.subr.mxu0 0.0
        %788 = vmatpush1.msra.mxu0 0.0
        %789 = vmatprep.subr.mxu0 0.0
        %790 = vmatpush1.msra.mxu0 0.0
        %791 = vmatprep.mubr.f32.mxu0 0.0
        %792 = vmatmul.mubr.f32.gmra.mrb[0].mxu0 %v716
        %v793 = vpop.f32.mrb[0].mxu0
        %v794 = vadd.f32 %v697, %v793
        %v795 = vpop.f32.mrb[0].mxu0
        %v796 = vadd.f32 %v697, %v795
        %797 = vmatprep.mubr.f32.mxu0 0.0
        %798 = vmatmul.mubr.f32.gmra.mrb[0].mxu0 %v719
        %v799 = vpop.f32.mrb[0].mxu0
        %v800 = vadd.f32 %v702, %v799
        %v801 = vpop.f32.mrb[0].mxu0
        %v802 = vadd.f32 %v702, %v801
        %803 = vmatprep.mubr.f32.mxu0 0.0
        %804 = vmatmul.mubr.f32.gmra.mrb[0].mxu0 %v722
        %v805 = vpop.f32.mrb[0].mxu0
        %v806 = vadd.f32 %v707, %v805
        %v807 = vpop.f32.mrb[0].mxu0
        %v808 = vadd.f32 %v707, %v807
        %809 = vmatprep.mubr.f32.mxu0 0.0
        %810 = vmatmul.mubr.f32.gmra.mrb[0].mxu0 %v725
        %v811 = vpop.f32.mrb[0].mxu0
        %v812 = vadd.f32 %v712, %v811
        %v813 = vpop.f32.mrb[0].mxu0
        %v814 = vadd.f32 %v712, %v813
        %815 = vdwg.mxu0
        %816 = vmatprep.subr.mxu0 %v657
        %817 = vmatpush1.msra.mxu0 %v656
        %818 = vmatprep.subr.mxu0 %v661
        %819 = vmatpush1.msra.mxu0 %v660
        %820 = vmatprep.subr.mxu0 %v665
        %821 = vmatpush1.msra.mxu0 %v664
        %822 = vmatprep.subr.mxu0 %v669
        %823 = vmatpush1.msra.mxu0 %v668
        %824 = vmatprep.subr.mxu0 %v673
        %825 = vmatpush1.msra.mxu0 %v672
        %826 = vmatprep.subr.mxu0 %v677
        %827 = vmatpush1.msra.mxu0 %v676
        %828 = vmatprep.subr.mxu0 %v681
        %829 = vmatpush1.msra.mxu0 %v680
        %830 = vmatprep.subr.mxu0 %v685
        %831 = vmatpush1.msra.mxu0 %v684
        %832 = vmatprep.subr.mxu0 0.0
        %833 = vmatpush1.msra.mxu0 0.0
        %834 = vmatprep.subr.mxu0 0.0
        %835 = vmatpush1.msra.mxu0 0.0
        %836 = vmatprep.subr.mxu0 0.0
        %837 = vmatpush1.msra.mxu0 0.0
        %838 = vmatprep.subr.mxu0 0.0
        %839 = vmatpush1.msra.mxu0 0.0
        %840 = vmatprep.subr.mxu0 0.0
        %841 = vmatpush1.msra.mxu0 0.0
        %842 = vmatprep.subr.mxu0 0.0
        %843 = vmatpush1.msra.mxu0 0.0
        %844 = vmatprep.subr.mxu0 0.0
        %845 = vmatpush1.msra.mxu0 0.0
        %846 = vmatprep.subr.mxu0 0.0
        %847 = vmatpush1.msra.mxu0 0.0
        %848 = vmatprep.subr.mxu0 0.0
        %849 = vmatpush1.msra.mxu0 0.0
        %850 = vmatprep.subr.mxu0 0.0
        %851 = vmatpush1.msra.mxu0 0.0
        %852 = vmatprep.subr.mxu0 0.0
        %853 = vmatpush1.msra.mxu0 0.0
        %854 = vmatprep.subr.mxu0 0.0
        %855 = vmatpush1.msra.mxu0 0.0
        %856 = vmatprep.subr.mxu0 0.0
        %857 = vmatpush1.msra.mxu0 0.0
        %858 = vmatprep.subr.mxu0 0.0
        %859 = vmatpush1.msra.mxu0 0.0
        %860 = vmatprep.subr.mxu0 0.0
        %861 = vmatpush1.msra.mxu0 0.0
        %862 = vmatprep.subr.mxu0 0.0
        %863 = vmatpush1.msra.mxu0 0.0
        %864 = vmatprep.subr.mxu0 0.0
        %865 = vmatpush1.msra.mxu0 0.0
        %866 = vmatprep.subr.mxu0 0.0
        %867 = vmatpush1.msra.mxu0 0.0
        %868 = vmatprep.subr.mxu0 0.0
        %869 = vmatpush1.msra.mxu0 0.0
        %870 = vmatprep.subr.mxu0 0.0
        %871 = vmatpush1.msra.mxu0 0.0
        %872 = vmatprep.subr.mxu0 0.0
        %873 = vmatpush1.msra.mxu0 0.0
        %874 = vmatprep.subr.mxu0 0.0
        %875 = vmatpush1.msra.mxu0 0.0
        %876 = vmatprep.subr.mxu0 0.0
        %877 = vmatpush1.msra.mxu0 0.0
        %878 = vmatprep.subr.mxu0 0.0
        %879 = vmatpush1.msra.mxu0 0.0
        %880 = vmatprep.mubr.f32.mxu0 0.0
        %881 = vmatmul.mubr.f32.gmra.mrb[0].mxu0 %v716
        %v882 = vpop.f32.mrb[0].mxu0
        %v883 = vadd.f32 %v697, %v882
        %v884 = vpop.f32.mrb[0].mxu0
        %v885 = vadd.f32 %v697, %v884
        %886 = vmatprep.mubr.f32.mxu0 0.0
        %887 = vmatmul.mubr.f32.gmra.mrb[0].mxu0 %v719
        %v888 = vpop.f32.mrb[0].mxu0
        %v889 = vadd.f32 %v702, %v888
        %v890 = vpop.f32.mrb[0].mxu0
        %v891 = vadd.f32 %v702, %v890
        %892 = vmatprep.mubr.f32.mxu0 0.0
        %893 = vmatmul.mubr.f32.gmra.mrb[0].mxu0 %v722
        %v894 = vpop.f32.mrb[0].mxu0
        %v895 = vadd.f32 %v707, %v894
        %v896 = vpop.f32.mrb[0].mxu0
        %v897 = vadd.f32 %v707, %v896
        %898 = vmatprep.mubr.f32.mxu0 0.0
        %899 = vmatmul.mubr.f32.gmra.mrb[0].mxu0 %v725
        %v900 = vpop.f32.mrb[0].mxu0
        %v901 = vadd.f32 %v712, %v900
        %v902 = vpop.f32.mrb[0].mxu0
        %v903 = vadd.f32 %v712, %v902
        %904 = vdwg.mxu0
        %v905 = vmax.f32 %v794, 0.0
        %v906 = vmax.f32 %v796, 0.0
        %v907 = vmax.f32 %v883, 0.0
        %v908 = vmax.f32 %v885, 0.0
        %v909 = vmax.f32 %v800, 0.0
        %v910 = vmax.f32 %v802, 0.0
        %v911 = vmax.f32 %v889, 0.0
        %v912 = vmax.f32 %v891, 0.0
        %v913 = vmax.f32 %v806, 0.0
        %v914 = vmax.f32 %v808, 0.0
        %v915 = vmax.f32 %v895, 0.0
        %v916 = vmax.f32 %v897, 0.0
        %v917 = vmax.f32 %v812, 0.0
        %v918 = vmax.f32 %v814, 0.0
        %v919 = vmax.f32 %v901, 0.0
        %v920 = vmax.f32 %v903, 0.0
        %v921 = vld [vmem:[%s5] sm:$0xff]
        %v922 = vld [vmem:[%s5 + $0x8] sm:$0xff]
        %v923 = vld [vmem:[%s5 + $0x10] sm:$0xff]
        %v924 = vld [vmem:[%s5 + $0x18] sm:$0xff]
        %v925 = vld [vmem:[%s6] sm:$0xff]
        %v926 = vld [vmem:[%s6 + $0x8] sm:$0xff]
        %v927 = vld [vmem:[%s6 + $0x10] sm:$0xff]
        %v928 = vld [vmem:[%s6 + $0x18] sm:$0xff]
        %930 = vset.pattern.permute.xlu0 0
        %931 = vperm.xlu0 %930, %v925
        %v932 = vpop.permute.xlu0 %931
        %935 = vset.pattern.permute.xlu0 0
        %936 = vperm.xlu0 %935, %v926
        %v937 = vpop.permute.xlu0 %936
        %940 = vset.pattern.permute.xlu0 0
        %941 = vperm.xlu0 %940, %v927
        %v942 = vpop.permute.xlu0 %941
        %945 = vset.pattern.permute.xlu0 0
        %946 = vperm.xlu0 %945, %v928
        %v947 = vpop.permute.xlu0 %946
        %vm949 = vcmask 261120
        %v951 = vsel %vm949, %v921, 0
        %v954 = vsel %vm949, %v922, 0
        %v957 = vsel %vm949, %v923, 0
        %v960 = vsel %vm949, %v924, 0
        %962 = vmatprep.subr.mxu0 %v906
        %963 = vmatpush1.msra.mxu0 %v905
        %964 = vmatprep.subr.mxu0 %v910
        %965 = vmatpush1.msra.mxu0 %v909
        %966 = vmatprep.subr.mxu0 %v914
        %967 = vmatpush1.msra.mxu0 %v913
        %968 = vmatprep.subr.mxu0 %v918
        %969 = vmatpush1.msra.mxu0 %v917
        %970 = vmatprep.subr.mxu0 0.0
        %971 = vmatpush1.msra.mxu0 0.0
        %972 = vmatprep.subr.mxu0 0.0
        %973 = vmatpush1.msra.mxu0 0.0
        %974 = vmatprep.subr.mxu0 0.0
        %975 = vmatpush1.msra.mxu0 0.0
        %976 = vmatprep.subr.mxu0 0.0
        %977 = vmatpush1.msra.mxu0 0.0
        %978 = vmatprep.subr.mxu0 0.0
        %979 = vmatpush1.msra.mxu0 0.0
        %980 = vmatprep.subr.mxu0 0.0
        %981 = vmatpush1.msra.mxu0 0.0
        %982 = vmatprep.subr.mxu0 0.0
        %983 = vmatpush1.msra.mxu0 0.0
        %984 = vmatprep.subr.mxu0 0.0
        %985 = vmatpush1.msra.mxu0 0.0
        %986 = vmatprep.subr.mxu0 0.0
        %987 = vmatpush1.msra.mxu0 0.0
        %988 = vmatprep.subr.mxu0 0.0
        %989 = vmatpush1.msra.mxu0 0.0
        %990 = vmatprep.subr.mxu0 0.0
        %991 = vmatpush1.msra.mxu0 0.0
        %992 = vmatprep.subr.mxu0 0.0
        %993 = vmatpush1.msra.mxu0 0.0
        %994 = vmatprep.subr.mxu0 0.0
        %995 = vmatpush1.msra.mxu0 0.0
        %996 = vmatprep.subr.mxu0 0.0
        %997 = vmatpush1.msra.mxu0 0.0
        %998 = vmatprep.subr.mxu0 0.0
        %999 = vmatpush1.msra.mxu0 0.0
        %1000 = vmatprep.subr.mxu0 0.0
        %1001 = vmatpush1.msra.mxu0 0.0
        %1002 = vmatprep.subr.mxu0 0.0
        %1003 = vmatpush1.msra.mxu0 0.0
        %1004 = vmatprep.subr.mxu0 0.0
        %1005 = vmatpush1.msra.mxu0 0.0
        %1006 = vmatprep.subr.mxu0 0.0
        %1007 = vmatpush1.msra.mxu0 0.0
        %1008 = vmatprep.subr.mxu0 0.0
        %1009 = vmatpush1.msra.mxu0 0.0
        %1010 = vmatprep.subr.mxu0 0.0
        %1011 = vmatpush1.msra.mxu0 0.0
        %1012 = vmatprep.subr.mxu0 0.0
        %1013 = vmatpush1.msra.mxu0 0.0
        %1014 = vmatprep.subr.mxu0 0.0
        %1015 = vmatpush1.msra.mxu0 0.0
        %1016 = vmatprep.subr.mxu0 0.0
        %1017 = vmatpush1.msra.mxu0 0.0
        %1018 = vmatprep.subr.mxu0 0.0
        %1019 = vmatpush1.msra.mxu0 0.0
        %1020 = vmatprep.subr.mxu0 0.0
        %1021 = vmatpush1.msra.mxu0 0.0
        %1022 = vmatprep.subr.mxu0 0.0
        %1023 = vmatpush1.msra.mxu0 0.0
        %1024 = vmatprep.subr.mxu0 0.0
        %1025 = vmatpush1.msra.mxu0 0.0
        %1026 = vmatprep.mubr.f32.mxu0 0.0
        %1027 = vmatmul.mubr.f32.gmra.mrb[0].mxu0 %v951
        %v1028 = vpop.f32.mrb[0].mxu0
        %v1029 = vadd.f32 %v932, %v1028
        %v1030 = vpop.f32.mrb[0].mxu0
        %v1031 = vadd.f32 %v932, %v1030
        %1032 = vmatprep.mubr.f32.mxu0 0.0
        %1033 = vmatmul.mubr.f32.gmra.mrb[0].mxu0 %v954
        %v1034 = vpop.f32.mrb[0].mxu0
        %v1035 = vadd.f32 %v937, %v1034
        %v1036 = vpop.f32.mrb[0].mxu0
        %v1037 = vadd.f32 %v937, %v1036
        %1038 = vmatprep.mubr.f32.mxu0 0.0
        %1039 = vmatmul.mubr.f32.gmra.mrb[0].mxu0 %v957
        %v1040 = vpop.f32.mrb[0].mxu0
        %v1041 = vadd.f32 %v942, %v1040
        %v1042 = vpop.f32.mrb[0].mxu0
        %v1043 = vadd.f32 %v942, %v1042
        %1044 = vmatprep.mubr.f32.mxu0 0.0
        %1045 = vmatmul.mubr.f32.gmra.mrb[0].mxu0 %v960
        %v1046 = vpop.f32.mrb[0].mxu0
        %v1047 = vadd.f32 %v947, %v1046
        %v1048 = vpop.f32.mrb[0].mxu0
        %v1049 = vadd.f32 %v947, %v1048
        %1050 = vdwg.mxu0
        %1051 = vmatprep.subr.mxu0 %v908
        %1052 = vmatpush1.msra.mxu0 %v907
        %1053 = vmatprep.subr.mxu0 %v912
        %1054 = vmatpush1.msra.mxu0 %v911
        %1055 = vmatprep.subr.mxu0 %v916
        %1056 = vmatpush1.msra.mxu0 %v915
        %1057 = vmatprep.subr.mxu0 %v920
        %1058 = vmatpush1.msra.mxu0 %v919
        %1059 = vmatprep.subr.mxu0 0.0
        %1060 = vmatpush1.msra.mxu0 0.0
        %1061 = vmatprep.subr.mxu0 0.0
        %1062 = vmatpush1.msra.mxu0 0.0
        %1063 = vmatprep.subr.mxu0 0.0
        %1064 = vmatpush1.msra.mxu0 0.0
        %1065 = vmatprep.subr.mxu0 0.0
        %1066 = vmatpush1.msra.mxu0 0.0
        %1067 = vmatprep.subr.mxu0 0.0
        %1068 = vmatpush1.msra.mxu0 0.0
        %1069 = vmatprep.subr.mxu0 0.0
        %1070 = vmatpush1.msra.mxu0 0.0
        %1071 = vmatprep.subr.mxu0 0.0
        %1072 = vmatpush1.msra.mxu0 0.0
        %1073 = vmatprep.subr.mxu0 0.0
        %1074 = vmatpush1.msra.mxu0 0.0
        %1075 = vmatprep.subr.mxu0 0.0
        %1076 = vmatpush1.msra.mxu0 0.0
        %1077 = vmatprep.subr.mxu0 0.0
        %1078 = vmatpush1.msra.mxu0 0.0
        %1079 = vmatprep.subr.mxu0 0.0
        %1080 = vmatpush1.msra.mxu0 0.0
        %1081 = vmatprep.subr.mxu0 0.0
        %1082 = vmatpush1.msra.mxu0 0.0
        %1083 = vmatprep.subr.mxu0 0.0
        %1084 = vmatpush1.msra.mxu0 0.0
        %1085 = vmatprep.subr.mxu0 0.0
        %1086 = vmatpush1.msra.mxu0 0.0
        %1087 = vmatprep.subr.mxu0 0.0
        %1088 = vmatpush1.msra.mxu0 0.0
        %1089 = vmatprep.subr.mxu0 0.0
        %1090 = vmatpush1.msra.mxu0 0.0
        %1091 = vmatprep.subr.mxu0 0.0
        %1092 = vmatpush1.msra.mxu0 0.0
        %1093 = vmatprep.subr.mxu0 0.0
        %1094 = vmatpush1.msra.mxu0 0.0
        %1095 = vmatprep.subr.mxu0 0.0
        %1096 = vmatpush1.msra.mxu0 0.0
        %1097 = vmatprep.subr.mxu0 0.0
        %1098 = vmatpush1.msra.mxu0 0.0
        %1099 = vmatprep.subr.mxu0 0.0
        %1100 = vmatpush1.msra.mxu0 0.0
        %1101 = vmatprep.subr.mxu0 0.0
        %1102 = vmatpush1.msra.mxu0 0.0
        %1103 = vmatprep.subr.mxu0 0.0
        %1104 = vmatpush1.msra.mxu0 0.0
        %1105 = vmatprep.subr.mxu0 0.0
        %1106 = vmatpush1.msra.mxu0 0.0
        %1107 = vmatprep.subr.mxu0 0.0
        %1108 = vmatpush1.msra.mxu0 0.0
        %1109 = vmatprep.subr.mxu0 0.0
        %1110 = vmatpush1.msra.mxu0 0.0
        %1111 = vmatprep.subr.mxu0 0.0
        %1112 = vmatpush1.msra.mxu0 0.0
        %1113 = vmatprep.subr.mxu0 0.0
        %1114 = vmatpush1.msra.mxu0 0.0
        %1115 = vmatprep.mubr.f32.mxu0 0.0
        %1116 = vmatmul.mubr.f32.gmra.mrb[0].mxu0 %v951
        %v1117 = vpop.f32.mrb[0].mxu0
        %v1118 = vadd.f32 %v932, %v1117
        %v1119 = vpop.f32.mrb[0].mxu0
        %v1120 = vadd.f32 %v932, %v1119
        %1121 = vmatprep.mubr.f32.mxu0 0.0
        %1122 = vmatmul.mubr.f32.gmra.mrb[0].mxu0 %v954
        %v1123 = vpop.f32.mrb[0].mxu0
        %v1124 = vadd.f32 %v937, %v1123
        %v1125 = vpop.f32.mrb[0].mxu0
        %v1126 = vadd.f32 %v937, %v1125
        %1127 = vmatprep.mubr.f32.mxu0 0.0
        %1128 = vmatmul.mubr.f32.gmra.mrb[0].mxu0 %v957
        %v1129 = vpop.f32.mrb[0].mxu0
        %v1130 = vadd.f32 %v942, %v1129
        %v1131 = vpop.f32.mrb[0].mxu0
        %v1132 = vadd.f32 %v942, %v1131
        %1133 = vmatprep.mubr.f32.mxu0 0.0
        %1134 = vmatmul.mubr.f32.gmra.mrb[0].mxu0 %v960
        %v1135 = vpop.f32.mrb[0].mxu0
        %v1136 = vadd.f32 %v947, %v1135
        %v1137 = vpop.f32.mrb[0].mxu0
        %v1138 = vadd.f32 %v947, %v1137
        %1139 = vdwg.mxu0
        %v1140 = vmax.f32 %v1029, 0.0
        %v1141 = vmax.f32 %v1031, 0.0
        %v1142 = vmax.f32 %v1118, 0.0
        %v1143 = vmax.f32 %v1120, 0.0
        %v1144 = vmax.f32 %v1035, 0.0
        %v1145 = vmax.f32 %v1037, 0.0
        %v1146 = vmax.f32 %v1124, 0.0
        %v1147 = vmax.f32 %v1126, 0.0
        %v1148 = vmax.f32 %v1041, 0.0
        %v1149 = vmax.f32 %v1043, 0.0
        %v1150 = vmax.f32 %v1130, 0.0
        %v1151 = vmax.f32 %v1132, 0.0
        %v1152 = vmax.f32 %v1047, 0.0
        %v1153 = vmax.f32 %v1049, 0.0
        %v1154 = vmax.f32 %v1136, 0.0
        %v1155 = vmax.f32 %v1138, 0.0
        %v1156 = vld [vmem:[%s7] sm:$0xff]
        %v1157 = vld [vmem:[%s7 + $0x8] sm:$0x1]
        %v1158 = vld [vmem:[%s8] sm:$0xff]
        %v1159 = vld [vmem:[%s8 + $0x8] sm:$0x1]
        %1161 = vset.pattern.permute.xlu0 0
        %1162 = vperm.xlu0 %1161, %v1158
        %v1163 = vpop.permute.xlu0 %1162
        %1166 = vset.pattern.permute.xlu0 0
        %1167 = vperm.xlu0 %1166, %v1159
        %v1168 = vpop.permute.xlu0 %1167
        %v1171 = vsel %vm949, %v1156, 0
        %v1174 = vsel %vm949, %v1157, 0
        %1176 = vmatprep.subr.mxu0 %v1141
        %1177 = vmatpush1.msra.mxu0 %v1140
        %1178 = vmatprep.subr.mxu0 %v1145
        %1179 = vmatpush1.msra.mxu0 %v1144
        %1180 = vmatprep.subr.mxu0 %v1149
        %1181 = vmatpush1.msra.mxu0 %v1148
        %1182 = vmatprep.subr.mxu0 %v1153
        %1183 = vmatpush1.msra.mxu0 %v1152
        %1184 = vmatprep.subr.mxu0 0.0
        %1185 = vmatpush1.msra.mxu0 0.0
        %1186 = vmatprep.subr.mxu0 0.0
        %1187 = vmatpush1.msra.mxu0 0.0
        %1188 = vmatprep.subr.mxu0 0.0
        %1189 = vmatpush1.msra.mxu0 0.0
        %1190 = vmatprep.subr.mxu0 0.0
        %1191 = vmatpush1.msra.mxu0 0.0
        %1192 = vmatprep.subr.mxu0 0.0
        %1193 = vmatpush1.msra.mxu0 0.0
        %1194 = vmatprep.subr.mxu0 0.0
        %1195 = vmatpush1.msra.mxu0 0.0
        %1196 = vmatprep.subr.mxu0 0.0
        %1197 = vmatpush1.msra.mxu0 0.0
        %1198 = vmatprep.subr.mxu0 0.0
        %1199 = vmatpush1.msra.mxu0 0.0
        %1200 = vmatprep.subr.mxu0 0.0
        %1201 = vmatpush1.msra.mxu0 0.0
        %1202 = vmatprep.subr.mxu0 0.0
        %1203 = vmatpush1.msra.mxu0 0.0
        %1204 = vmatprep.subr.mxu0 0.0
        %1205 = vmatpush1.msra.mxu0 0.0
        %1206 = vmatprep.subr.mxu0 0.0
        %1207 = vmatpush1.msra.mxu0 0.0
        %1208 = vmatprep.subr.mxu0 0.0
        %1209 = vmatpush1.msra.mxu0 0.0
        %1210 = vmatprep.subr.mxu0 0.0
        %1211 = vmatpush1.msra.mxu0 0.0
        %1212 = vmatprep.subr.mxu0 0.0
        %1213 = vmatpush1.msra.mxu0 0.0
        %1214 = vmatprep.subr.mxu0 0.0
        %1215 = vmatpush1.msra.mxu0 0.0
        %1216 = vmatprep.subr.mxu0 0.0
        %1217 = vmatpush1.msra.mxu0 0.0
        %1218 = vmatprep.subr.mxu0 0.0
        %1219 = vmatpush1.msra.mxu0 0.0
        %1220 = vmatprep.subr.mxu0 0.0
        %1221 = vmatpush1.msra.mxu0 0.0
        %1222 = vmatprep.subr.mxu0 0.0
        %1223 = vmatpush1.msra.mxu0 0.0
        %1224 = vmatprep.subr.mxu0 0.0
        %1225 = vmatpush1.msra.mxu0 0.0
        %1226 = vmatprep.subr.mxu0 0.0
        %1227 = vmatpush1.msra.mxu0 0.0
        %1228 = vmatprep.subr.mxu0 0.0
        %1229 = vmatpush1.msra.mxu0 0.0
        %1230 = vmatprep.subr.mxu0 0.0
        %1231 = vmatpush1.msra.mxu0 0.0
        %1232 = vmatprep.subr.mxu0 0.0
        %1233 = vmatpush1.msra.mxu0 0.0
        %1234 = vmatprep.subr.mxu0 0.0
        %1235 = vmatpush1.msra.mxu0 0.0
        %1236 = vmatprep.subr.mxu0 0.0
        %1237 = vmatpush1.msra.mxu0 0.0
        %1238 = vmatprep.subr.mxu0 0.0
        %1239 = vmatpush1.msra.mxu0 0.0
        %1240 = vmatprep.mubr.f32.mxu0 0.0
        %1241 = vmatmul.mubr.f32.gmra.mrb[0].mxu0 %v1171
        %v1242 = vpop.f32.mrb[0].mxu0
        %v1243 = vadd.f32 %v1163, %v1242
        %v1244 = vpop.f32.mrb[0].mxu0
        %v1245 = vadd.f32 %v1163, %v1244
        %1246 = vmatprep.mubr.f32.mxu0 0.0
        %1247 = vmatmul.mubr.f32.gmra.mrb[0].mxu0 %v1174
        %v1248 = vpop.f32.mrb[0].mxu0
        %v1249 = vadd.f32 %v1168, %v1248
        %v1250 = vpop.f32.mrb[0].mxu0
        %v1251 = vadd.f32 %v1168, %v1250
        %1252 = vdwg.mxu0
        %1253 = vmatprep.subr.mxu0 %v1143
        %1254 = vmatpush1.msra.mxu0 %v1142
        %1255 = vmatprep.subr.mxu0 %v1147
        %1256 = vmatpush1.msra.mxu0 %v1146
        %1257 = vmatprep.subr.mxu0 %v1151
        %1258 = vmatpush1.msra.mxu0 %v1150
        %1259 = vmatprep.subr.mxu0 %v1155
        %1260 = vmatpush1.msra.mxu0 %v1154
        %1261 = vmatprep.subr.mxu0 0.0
        %1262 = vmatpush1.msra.mxu0 0.0
        %1263 = vmatprep.subr.mxu0 0.0
        %1264 = vmatpush1.msra.mxu0 0.0
        %1265 = vmatprep.subr.mxu0 0.0
        %1266 = vmatpush1.msra.mxu0 0.0
        %1267 = vmatprep.subr.mxu0 0.0
        %1268 = vmatpush1.msra.mxu0 0.0
        %1269 = vmatprep.subr.mxu0 0.0
        %1270 = vmatpush1.msra.mxu0 0.0
        %1271 = vmatprep.subr.mxu0 0.0
        %1272 = vmatpush1.msra.mxu0 0.0
        %1273 = vmatprep.subr.mxu0 0.0
        %1274 = vmatpush1.msra.mxu0 0.0
        %1275 = vmatprep.subr.mxu0 0.0
        %1276 = vmatpush1.msra.mxu0 0.0
        %1277 = vmatprep.subr.mxu0 0.0
        %1278 = vmatpush1.msra.mxu0 0.0
        %1279 = vmatprep.subr.mxu0 0.0
        %1280 = vmatpush1.msra.mxu0 0.0
        %1281 = vmatprep.subr.mxu0 0.0
        %1282 = vmatpush1.msra.mxu0 0.0
        %1283 = vmatprep.subr.mxu0 0.0
        %1284 = vmatpush1.msra.mxu0 0.0
        %1285 = vmatprep.subr.mxu0 0.0
        %1286 = vmatpush1.msra.mxu0 0.0
        %1287 = vmatprep.subr.mxu0 0.0
        %1288 = vmatpush1.msra.mxu0 0.0
        %1289 = vmatprep.subr.mxu0 0.0
        %1290 = vmatpush1.msra.mxu0 0.0
        %1291 = vmatprep.subr.mxu0 0.0
        %1292 = vmatpush1.msra.mxu0 0.0
        %1293 = vmatprep.subr.mxu0 0.0
        %1294 = vmatpush1.msra.mxu0 0.0
        %1295 = vmatprep.subr.mxu0 0.0
        %1296 = vmatpush1.msra.mxu0 0.0
        %1297 = vmatprep.subr.mxu0 0.0
        %1298 = vmatpush1.msra.mxu0 0.0
        %1299 = vmatprep.subr.mxu0 0.0
        %1300 = vmatpush1.msra.mxu0 0.0
        %1301 = vmatprep.subr.mxu0 0.0
        %1302 = vmatpush1.msra.mxu0 0.0
        %1303 = vmatprep.subr.mxu0 0.0
        %1304 = vmatpush1.msra.mxu0 0.0
        %1305 = vmatprep.subr.mxu0 0.0
        %1306 = vmatpush1.msra.mxu0 0.0
        %1307 = vmatprep.subr.mxu0 0.0
        %1308 = vmatpush1.msra.mxu0 0.0
        %1309 = vmatprep.subr.mxu0 0.0
        %1310 = vmatpush1.msra.mxu0 0.0
        %1311 = vmatprep.subr.mxu0 0.0
        %1312 = vmatpush1.msra.mxu0 0.0
        %1313 = vmatprep.subr.mxu0 0.0
        %1314 = vmatpush1.msra.mxu0 0.0
        %1315 = vmatprep.subr.mxu0 0.0
        %1316 = vmatpush1.msra.mxu0 0.0
        %1317 = vmatprep.mubr.f32.mxu0 0.0
        %1318 = vmatmul.mubr.f32.gmra.mrb[0].mxu0 %v1171
        %v1319 = vpop.f32.mrb[0].mxu0
        %v1320 = vadd.f32 %v1163, %v1319
        %v1321 = vpop.f32.mrb[0].mxu0
        %v1322 = vadd.f32 %v1163, %v1321
        %1323 = vmatprep.mubr.f32.mxu0 0.0
        %1324 = vmatmul.mubr.f32.gmra.mrb[0].mxu0 %v1174
        %v1325 = vpop.f32.mrb[0].mxu0
        %v1326 = vadd.f32 %v1168, %v1325
        %v1327 = vpop.f32.mrb[0].mxu0
        %v1328 = vadd.f32 %v1168, %v1327
        %1329 = vdwg.mxu0
        %1330 = vst [vmem:[%s322] sm:$0xff] %v1243
        %1331 = vst [vmem:[%s322 + $0x8] sm:$0xff] %v1245
        %1332 = vst [vmem:[%s322 + $0x10] sm:$0xff] %v1320
        %1333 = vst [vmem:[%s322 + $0x18] sm:$0xff] %v1322
        %1334 = vst [vmem:[%s322 + $0x20] sm:$0x1] %v1249
        %1335 = vst [vmem:[%s322 + $0x28] sm:$0x1] %v1251
        %1336 = vst [vmem:[%s322 + $0x30] sm:$0x1] %v1326
        %1337 = vst [vmem:[%s322 + $0x38] sm:$0x1] %v1328
        %s1338 = sand.u32 %s222, 1
        %s1339 = sand.u32 %s222, 1
        %s1340 = smul.addr %s1339, 64
        %s1341 = scalar_lea.vmem [#allocation2], %s1340
        // Predicated region
        $region57: #{traffic_model_forward.1} parent=55 // pred_check
          %p1342 = pneg %p232
        $region58: #{traffic_model_forward.1} parent=55 // pred_check_branch
          %1344 = sbr.rel (%p1342) target = $region60
        $region59: #{traffic_model_forward.1} parent=55 // pred_region
          %s1345 = smul.u32 4, %s20
          %s1346 = smul.addr %s1345, 8
          %s1347 = scalar_lea.vmem %s9, %s1346
          // Predicated region
          $region61: #{traffic_model_forward.1} parent=59 // pred_check
            _
          $region62: #{traffic_model_forward.1} parent=59 // pred_check_branch
            %1349 = sbr.rel (0) target = $region64
          $region63: #{traffic_model_forward.1} parent=59 // pred_region
            // Predicated region
            $region65: #{traffic_model_forward.1} parent=63 // pred_check
              _
            $region66: #{traffic_model_forward.1} parent=63 // pred_check_branch
              %1351 = sbr.rel (0) target = $region68
            $region67: #{traffic_model_forward.1} parent=63 // pred_region
              loop: start=0, step=1, limit=1
              $region69: #{traffic_model_forward.1} parent=67 // loop_pre_header
                _
              $region70: #{traffic_model_forward.1} parent=67 // loop_header
                %s1353 = sphi 0, %s1357
                %p1354 = scmp.ge.s32.totalorder %s1353, 1
                %s1358 = sphi %s1341, %s1341
                %s1359 = sphi %s1347, %s1347
              $region71: #{traffic_model_forward.1} parent=67 // loop_header_branch
                %1356 = sbr.rel (%p1354) target = $region75
              $region72: #{traffic_model_forward.1} parent=67 // loop_body
                %v1360 = vld [vmem:[%s1358] sm:$0xff]
                %1361 = vst [vmem:[%s1359] sm:$0xff] %v1360
                %v1362 = vld [vmem:[%s1358 + $0x8] sm:$0xff]
                %1363 = vst [vmem:[%s1359 + $0x8] sm:$0xff] %v1362
                %v1364 = vld [vmem:[%s1358 + $0x10] sm:$0xff]
                %1365 = vst [vmem:[%s1359 + $0x10] sm:$0xff] %v1364
                %v1366 = vld [vmem:[%s1358 + $0x18] sm:$0xff]
                %1367 = vst [vmem:[%s1359 + $0x18] sm:$0xff] %v1366
                %v1368 = vld [vmem:[%s1358 + $0x20] sm:$0xff]
                %1369 = vst [vmem:[%s1359 + $0x40] sm:$0xff] %v1368
                %v1370 = vld [vmem:[%s1358 + $0x28] sm:$0xff]
                %1371 = vst [vmem:[%s1359 + $0x48] sm:$0xff] %v1370
                %v1372 = vld [vmem:[%s1358 + $0x30] sm:$0xff]
                %1373 = vst [vmem:[%s1359 + $0x50] sm:$0xff] %v1372
                %v1374 = vld [vmem:[%s1358 + $0x38] sm:$0xff]
                %1375 = vst [vmem:[%s1359 + $0x58] sm:$0xff] %v1374
              $region73: #{traffic_model_forward.1} parent=67 // loop_footer
                %s1357 = sadd.s32 1, %s1353
              $region74: #{traffic_model_forward.1} parent=67 // loop_footer_branch
                %1352 = sbr.rel target = $region70
              $region75: #{traffic_model_forward.1} parent=67 // loop_exit
                _
            $region68: #{traffic_model_forward.1} parent=63 // pred_fallthru
              _
            // Predicated region
            $region76: #{traffic_model_forward.1} parent=63 // pred_check
              _
            $region77: #{traffic_model_forward.1} parent=63 // pred_check_branch
              %1377 = sbr.rel target = $region79
            $region78: #{traffic_model_forward.1} parent=63 // pred_region
              _
            $region79: #{traffic_model_forward.1} parent=63 // pred_fallthru
              _
          $region64: #{traffic_model_forward.1} parent=59 // pred_fallthru
            _
          %1378 = vnop
        $region60: #{traffic_model_forward.1} parent=55 // pred_fallthru
          _
      $region56: #{traffic_model_forward.1} parent=5 // pred_fallthru
        _
      %p1379 = scmp.le.s32.totalorder 2, %s15
      // Predicated region
      $region80: #{traffic_model_forward.1} parent=5 // pred_check
        %p1380 = pneg %p1379
      $region81: #{traffic_model_forward.1} parent=5 // pred_check_branch
        %1382 = sbr.rel (%p1380) target = $region83
      $region82: #{traffic_model_forward.1} parent=5 // pred_region
        %s1383 = ssub.s32 %s15, 2
        // Predicated region
        $region84: #{traffic_model_forward.1} parent=82 // pred_check
          %p1384 = pneg %p238
        $region85: #{traffic_model_forward.1} parent=82 // pred_check_branch
          %1386 = sbr.rel (%p1384) target = $region87
        $region86: #{traffic_model_forward.1} parent=82 // pred_region
          %s1387 = sand.u32 %s223, 1
          %s1388 = sand.u32 %s223, 1
          %s1389 = smul.addr %s1388, 64
          %s1390 = scalar_lea.vmem [#allocation2], %s1389
        $region87: #{traffic_model_forward.1} parent=82 // pred_fallthru
          _
      $region83: #{traffic_model_forward.1} parent=5 // pred_fallthru
        _
    $region6: #{traffic_model_forward.1} parent=1 // loop_footer
      %s19 = sadd.s32 1, %s15
    $region7: #{traffic_model_forward.1} parent=1 // loop_footer_branch
      %14 = sbr.rel target = $region3
    $region8: #{traffic_model_forward.1} parent=1 // loop_exit
      _

</llo_original>
